<compile_context>
chip_gen: v7x
topology: tpu7x:2x2x1
jax: 0.10.0
libtpu: 0.0.40
codegen_flags: <defaults>
</compile_context>

<pallas_src>
import jax
import jax.numpy as jnp
import numpy as np
from jax import lax
from jax.experimental import pallas as pl
from jax.experimental.pallas import tpu as pltpu

CLS = 20
NCROPS = 10
_LANES = 128
_DEFAULT_TILE = 16384     # sweep 16K-32K; 16K fits every generation's VMEM budget
_NCORES = 2               # leading "parallel" grid axis (v7x megacore split)


def _round_up(x, m):
    return ((x + m - 1) // m) * m


def _cdiv(a, b):
    return (a + b - 1) // b


def _logsig_neg(x):
    # log(sigmoid(-x)) = -softplus(x) = -(max(x, 0) + log1p(exp(-|x|)))
    return -(jnp.maximum(x, 0.0) + jnp.log1p(jnp.exp(-jnp.abs(x))))


def _make_local_kernel(kb, tile):
    """Kernel over local crops: columns = crops (lane axis), rows = classes."""

    def kernel(l_ref, y_ref, m_ref, out_ref):
        c = pl.program_id(0)              # core-split index
        i = pl.program_id(1)              # lane-tile index within this core
        tpc = pl.num_programs(1)

        @pl.when(i == 0)
        def _():
            out_ref[...] = jnp.zeros_like(out_ref)

        x = l_ref[...].astype(jnp.float32)          # (CLS, tile) logits
        y = y_ref[...].astype(jnp.float32)          # (CLS, tile) soft labels
        m = m_ref[...].astype(jnp.float32)          # (1,   tile) inclusion mask

        # per-element loss:  y*logsig(x) + (1-y)*logsig(-x) = logsig(-x) + y*x
        t = _logsig_neg(x) + y * x                  # (CLS, tile)
        col_sum = jnp.sum(t, axis=0, keepdims=True)  # (1, tile) sublane reduce

        # Inclusion = precomputed crop mask AND logical column < kb.  The index
        # guard covers the partial last block and the clamped duplicate block
        # of the core split; jnp.where keeps garbage (even NaN) out of the sum.
        tile_idx = c * tpc + i
        col = tile_idx * tile + lax.broadcasted_iota(jnp.int32, (1, tile), 1)
        keep = jnp.logical_and(m > 0.5, col < kb)
        contrib = jnp.where(keep, col_sum, 0.0)     # (1, tile)

        out_ref[...] = out_ref[...] + contrib[None]  # (1, 1, tile)

    return kernel


def ctc_loss_neg(local_output, global_output, flags, cls_input,
                 ncrops=NCROPS, tile=None):
    b = flags.shape[0]
    k = ncrops - 2
    kb = k * b
    f32 = jnp.float32

    # ---------------- global crops: tiny (2b x CLS), plain jnp ----------------
    xg = global_output.reshape(2 * b, CLS).astype(f32)
    yg = jnp.tile(cls_input.astype(f32), (2, 1))                    # (2b, CLS)
    global_sum = jnp.sum(_logsig_neg(xg) + yg * xg)

    # -------- local crops: lane-dense relayout (transpose + cast, fused) ------
    # column order is crop-major:  j = crop_idx * b + sample_idx
    l = jnp.transpose(local_output.reshape(kb, CLS))                # (CLS, kb)
    tf = flags[:, 2:, :]                                            # (b, k, CLS+1)
    include = jnp.logical_and(
        tf[:, :, 0] != 1.0,
        jnp.max(tf, axis=-1) != jnp.min(tf, axis=-1))               # (b, k)
    cnt_local = jnp.sum(include.astype(f32))
    m = jnp.transpose(include).reshape(1, kb).astype(jnp.bfloat16)  # (1, kb)
    y = jnp.transpose(tf[:, :, 1:], (2, 1, 0)).reshape(CLS, kb).astype(jnp.bfloat16)

    # ------------- lane tiling (pad only up to a multiple of 128) -------------
    kb_pad = _round_up(kb, _LANES)
    if kb_pad != kb:
        pad = kb_pad - kb
        l = jnp.pad(l, ((0, 0), (0, pad)))
        y = jnp.pad(y, ((0, 0), (0, pad)))
        m = jnp.pad(m, ((0, 0), (0, pad)))

    if tile is None:
        tile = _DEFAULT_TILE
    tile = min(_round_up(tile, _LANES), kb_pad)
    num_tiles = _cdiv(kb_pad, tile)
    tiles_per_core = _cdiv(num_tiles, _NCORES)
    last_tile = num_tiles - 1

    def in_map(c, i):
        # clamp so the duplicated slot of an odd split never issues an OOB DMA;
        # the in-kernel logical-column mask zeroes its contribution.
        return (0, jnp.minimum(c * tiles_per_core + i, last_tile))

    grid_spec = pltpu.PrefetchScalarGridSpec(
        num_scalar_prefetch=0,
        grid=(_NCORES, tiles_per_core),
        in_specs=[
            pl.BlockSpec((CLS, tile), in_map),        # local logits tile
            pl.BlockSpec((CLS, tile), in_map),        # local labels tile (bf16)
            pl.BlockSpec((1, tile), in_map),          # inclusion mask (bf16)
        ],
        out_specs=pl.BlockSpec((1, 1, tile), lambda c, i: (c, 0, 0)),
    )

    partials = pl.pallas_call(
        _make_local_kernel(kb, tile),
        out_shape=jax.ShapeDtypeStruct((_NCORES, 1, tile), jnp.float32),
        grid_spec=grid_spec,
        compiler_params=pltpu.CompilerParams(
            dimension_semantics=("parallel", "arbitrary"),
            vmem_limit_bytes=32 * 1024 * 1024),
    )(l, y, m)

    local_sum = jnp.sum(partials)
    cnt = cnt_local + 2.0 * b
    return -(local_sum + global_sum) / (cnt * float(CLS))


def ctc_loss_neg_ref(local_output, global_output, flags, cls_input, ncrops=NCROPS):
    # pure numpy reference mirroring the PyTorch loop semantics
    b = flags.shape[0]
    g = np.asarray(global_output, dtype=np.float64).reshape(2, b, CLS).transpose(1, 0, 2)
    l = np.asarray(local_output, dtype=np.float64).reshape(ncrops - 2, b, CLS).transpose(1, 0, 2)
    flags = np.asarray(flags, dtype=np.float64)
    cls_input = np.asarray(cls_input, dtype=np.float64)

    def logsig(z):
        return np.minimum(z, 0.0) - np.log1p(np.exp(-np.abs(z)))

    def mlsm(x, y):
        return float(-np.mean(y * logsig(x) + (1 - y) * logsig(-x)))

    total, cnt = 0.0, 0
    for i in range(b):
        for gi in range(2):
            total += mlsm(g[i, gi], cls_input[i]); cnt += 1
    for i in range(b):
        for ci in range(ncrops - 2):
            tf = flags[i, ci + 2]
            if tf[0] == 1:
                continue
            if len(np.unique(tf)) == 1:
                continue
            total += mlsm(l[i, ci], tf[1:]); cnt += 1
    return total / cnt


if __name__ == "__main__":
    def make_inputs(key, b):
        k1, k2, k3, k4 = jax.random.split(key, 4)
        global_output = jax.random.normal(k1, (2 * b, CLS), dtype=jnp.float32)
        local_output = jax.random.normal(k2, ((NCROPS - 2) * b, CLS), dtype=jnp.float32)
        cls_input = (jax.random.uniform(k3, (b, CLS)) > 0.5).astype(jnp.float32)
        flags = (jax.random.uniform(k4, (b, NCROPS, CLS + 1)) > 0.5).astype(jnp.float32)
        # exercise the skip branches deterministically
        flags = flags.at[0, 2, 0].set(1.0)   # flag marker == 1  -> skipped
        flags = flags.at[1, 3, :].set(0.0)   # constant flag vec -> skipped
        flags = flags.at[2, 4, 0].set(0.0)   # valid crop        -> counted
        return local_output, global_output, flags, cls_input

    ctc_jit = jax.jit(ctc_loss_neg, static_argnames=("ncrops", "tile"))

    # Small case: single lane tile, core-split duplicate slot fully masked.
    lo, go, fg, ci = make_inputs(jax.random.PRNGKey(0), 4)
    loss = ctc_jit(lo, go, fg, ci)
    jax.block_until_ready(loss)
    ref = ctc_loss_neg_ref(lo, go, fg, ci)
    assert np.allclose(float(loss), ref, rtol=1e-4, atol=1e-4), (float(loss), ref)

    # Larger case with a forced 128-lane tile -> multi-step grid per core, a
    # partial last block (kb=264 -> padded 384), and an odd tile count so the
    # clamped duplicate block path is exercised.
    lo, go, fg, ci = make_inputs(jax.random.PRNGKey(1), 33)
    loss = ctc_jit(lo, go, fg, ci, tile=128)
    jax.block_until_ready(loss)
    ref = ctc_loss_neg_ref(lo, go, fg, ci)
    assert np.allclose(float(loss), ref, rtol=1e-4, atol=1e-4), (float(loss), ref)

    print("KERNEL_OK")
</pallas_src>

<mosaic_0001>
module attributes {stable_mosaic.version = 11 : i64} {
  func.func @kernel(%arg0: i32, %arg1: i32, %arg2: memref<20x128xf32, #tpu.memory_space<vmem>>, %arg3: memref<20x128xbf16, #tpu.memory_space<vmem>>, %arg4: memref<1x128xbf16, #tpu.memory_space<vmem>>, %arg5: memref<1x1x128xf32, #tpu.memory_space<vmem>>) attributes {dimension_semantics = [#tpu.dimension_semantics<parallel>, #tpu.dimension_semantics<arbitrary>], iteration_bounds = array<i64: 2, 1>, scalar_prefetch = 0 : i64, scratch_operands = 0 : i64, tpu.core_type = #tpu.core_type<tc>, window_params = [{transform_indices = @transform_0, window_bounds = array<i64: 20, 128>}, {transform_indices = @transform_1, window_bounds = array<i64: 20, 128>}, {transform_indices = @transform_2, window_bounds = array<i64: 1, 128>}, {transform_indices = @transform_3, window_bounds = array<i64: 1, 1, 128>}]} {
    %c0_i32 = arith.constant 0 : i32
    %0 = arith.cmpi eq, %arg1, %c0_i32 : i32
    %1 = arith.extui %0 : i1 to i32
    %c0_i32_0 = arith.constant 0 : i32
    %2 = arith.cmpi ne, %1, %c0_i32_0 : i32
    scf.if %2 {
      %cst_17 = arith.constant 0.000000e+00 : f32
      %39 = vector.broadcast %cst_17 : f32 to vector<1x1x128xf32>
      %c0_18 = arith.constant 0 : index
      %c0_19 = arith.constant 0 : index
      %c0_20 = arith.constant 0 : index
      %40 = vector.load %arg5[%c0_18, %c0_19, %c0_20] : memref<1x1x128xf32, #tpu.memory_space<vmem>>, vector<1x1x128xf32>
      tpu.vector_store %arg5[%c0_18, %c0_19, %c0_20], %39 {strides = array<i32>} : memref<1x1x128xf32, #tpu.memory_space<vmem>>, vector<1x1x128xf32>,
    } else {
    }
    %c0 = arith.constant 0 : index
    %c0_1 = arith.constant 0 : index
    %3 = vector.load %arg2[%c0, %c0_1] : memref<20x128xf32, #tpu.memory_space<vmem>>, vector<20x128xf32>
    %c0_2 = arith.constant 0 : index
    %c0_3 = arith.constant 0 : index
    %4 = vector.load %arg3[%c0_2, %c0_3] : memref<20x128xbf16, #tpu.memory_space<vmem>>, vector<20x128xbf16>
    %5 = arith.extf %4 : vector<20x128xbf16> to vector<20x128xf32>
    %c0_4 = arith.constant 0 : index
    %c0_5 = arith.constant 0 : index
    %6 = vector.load %arg4[%c0_4, %c0_5] : memref<1x128xbf16, #tpu.memory_space<vmem>>, vector<1x128xbf16>
    %7 = arith.extf %6 : vector<1x128xbf16> to vector<1x128xf32>
    %cst = arith.constant 0.000000e+00 : f32
    %8 = vector.broadcast %cst : f32 to vector<20x128xf32>
    %9 = arith.maximumf %3, %8 : vector<20x128xf32>
    %10 = math.absf %3 : vector<20x128xf32>
    %cst_6 = arith.constant 0.000000e+00 : f32
    %11 = vector.broadcast %cst_6 : f32 to vector<20x128xf32>
    %12 = arith.subf %11, %10 : vector<20x128xf32>
    %13 = math.exp %12 : vector<20x128xf32>
    %14 = math.log1p %13 : vector<20x128xf32>
    %15 = arith.addf %9, %14 : vector<20x128xf32>
    %cst_7 = arith.constant 0.000000e+00 : f32
    %16 = vector.broadcast %cst_7 : f32 to vector<20x128xf32>
    %17 = arith.subf %16, %15 : vector<20x128xf32>
    %18 = arith.mulf %5, %3 : vector<20x128xf32>
    %19 = arith.addf %17, %18 : vector<20x128xf32>
    %cst_8 = arith.constant dense<0.000000e+00> : vector<128xf32>
    %20 = vector.multi_reduction <add>, %19, %cst_8 [0] : vector<20x128xf32> to vector<128xf32>
    %21 = vector.shape_cast %20 : vector<128xf32> to vector<1x128xf32>
    %c1_i32 = arith.constant 1 : i32
    %22 = arith.muli %arg0, %c1_i32 : i32
    %23 = arith.addi %22, %arg1 : i32
    %c128_i32 = arith.constant 128 : i32
    %24 = arith.muli %23, %c128_i32 : i32
    %25 = tpu.iota {dimensions = array<i32: 1>} : vector<1x128xi32>
    %26 = vector.broadcast %24 : i32 to vector<1x128xi32>
    %27 = arith.addi %26, %25 : vector<1x128xi32>
    %cst_9 = arith.constant 5.000000e-01 : f32
    %28 = vector.broadcast %cst_9 : f32 to vector<1x128xf32>
    %29 = arith.cmpf ogt, %7, %28 : vector<1x128xf32>
    %c32_i32 = arith.constant 32 : i32
    %30 = vector.broadcast %c32_i32 : i32 to vector<1x128xi32>
    %31 = arith.cmpi slt, %27, %30 : vector<1x128xi32>
    %32 = arith.andi %29, %31 : vector<1x128xi1>
    %cst_10 = arith.constant 0.000000e+00 : f32
    %33 = vector.broadcast %cst_10 : f32 to vector<1x128xf32>
    %34 = arith.select %32, %21, %33 : vector<1x128xi1>, vector<1x128xf32>
    %c0_11 = arith.constant 0 : index
    %c0_12 = arith.constant 0 : index
    %c0_13 = arith.constant 0 : index
    %35 = vector.load %arg5[%c0_11, %c0_12, %c0_13] : memref<1x1x128xf32, #tpu.memory_space<vmem>>, vector<1x1x128xf32>
    %36 = vector.shape_cast %34 : vector<1x128xf32> to vector<1x1x128xf32>
    %37 = arith.addf %35, %36 : vector<1x1x128xf32>
    %c0_14 = arith.constant 0 : index
    %c0_15 = arith.constant 0 : index
    %c0_16 = arith.constant 0 : index
    %38 = vector.load %arg5[%c0_14, %c0_15, %c0_16] : memref<1x1x128xf32, #tpu.memory_space<vmem>>, vector<1x1x128xf32>
    tpu.vector_store %arg5[%c0_14, %c0_15, %c0_16], %37 {strides = array<i32>} : memref<1x1x128xf32, #tpu.memory_space<vmem>>, vector<1x1x128xf32>,
    return
  }
  func.func @transform_0(%arg0: i32, %arg1: i32) -> (i32, i32) {
    %c1_i32 = arith.constant 1 : i32
    %0 = arith.muli %arg0, %c1_i32 : i32
    %1 = arith.addi %0, %arg1 : i32
    %c0_i32 = arith.constant 0 : i32
    %2 = arith.minsi %1, %c0_i32 : i32
    %c0_i32_0 = arith.constant 0 : i32
    %c0_i32_1 = arith.constant 0 : i32
    return %c0_i32_0, %2 : i32, i32
  }
  func.func @transform_1(%arg0: i32, %arg1: i32) -> (i32, i32) {
    %c1_i32 = arith.constant 1 : i32
    %0 = arith.muli %arg0, %c1_i32 : i32
    %1 = arith.addi %0, %arg1 : i32
    %c0_i32 = arith.constant 0 : i32
    %2 = arith.minsi %1, %c0_i32 : i32
    %c0_i32_0 = arith.constant 0 : i32
    %c0_i32_1 = arith.constant 0 : i32
    return %c0_i32_0, %2 : i32, i32
  }
  func.func @transform_2(%arg0: i32, %arg1: i32) -> (i32, i32) {
    %c1_i32 = arith.constant 1 : i32
    %0 = arith.muli %arg0, %c1_i32 : i32
    %1 = arith.addi %0, %arg1 : i32
    %c0_i32 = arith.constant 0 : i32
    %2 = arith.minsi %1, %c0_i32 : i32
    %c0_i32_0 = arith.constant 0 : i32
    %c0_i32_1 = arith.constant 0 : i32
    return %c0_i32_0, %2 : i32, i32
  }
  func.func @transform_3(%arg0: i32, %arg1: i32) -> (i32, i32, i32) {
    %c0_i32 = arith.constant 0 : i32
    %c0_i32_0 = arith.constant 0 : i32
    %c0_i32_1 = arith.constant 0 : i32
    return %arg0, %c0_i32, %c0_i32_0 : i32, i32, i32
  }
}

</mosaic_0001>

<llo_original>
// kernel: ctc_loss_neg.1
$region0: #{ctc_loss_neg.1}
  #allocation0 [shape = 'u32[]', space=smem, size = 0x4, offset = 0x4, fixed_abs, tag = 'smem constant byte address 0x4 - core index']
  #allocation1 [shape = 'u32[144,128]{1,0:T(1,128)}', space=vmem, size = 0x12000, scoped, tag = 'internal scratch']
  %s0 = inlined_call_operand.vmem [shape: f32[20,128], index: 0, kind: input, shape index: {}]
  %s1 = inlined_call_operand.vmem [shape: bf16[20,128], index: 1, kind: input, shape index: {}]
  %s2 = inlined_call_operand.vmem [shape: bf16[1,128], index: 2, kind: input, shape index: {}]
  %s3 = inlined_call_operand.vmem [shape: f32[2,1,128], index: 3, kind: output, shape index: {}]
  %s4 = sld [smem:[#allocation0]]
  $region49: #{ctc_loss_neg.1} parent=0
    _
  %s6 = ssub.s32 1, %s4
  %s7 = scalar_select 0, %s6, %s4
  loop: start=0, step=1, limit=4
  $region2: #{ctc_loss_neg.1} parent=0 // loop_pre_header
    _
  $region3: #{ctc_loss_neg.1} parent=0 // loop_header
    %s9 = sphi 0, %s13
    %p10 = scmp.ge.s32.totalorder %s9, 4
    %s16 = sphi 0, %s28
    %s17 = sphi 0, %s24
    %s18 = sphi 0, %s16
    %s19 = sphi 0, %s17
    %s20 = sphi 0, %s18
    %s21 = sphi 0, %s19
    %s37 = sphi 0, %s39
    %s40 = sphi 0, %s37
    %s41 = sphi 0, %s40
    %s57 = sphi 0, %s41
    %s69 = sphi 0, %s71
    %s72 = sphi 0, %s69
    %s73 = sphi 0, %s72
    %s89 = sphi 0, %s73
    %s101 = sphi 0, %s103
    %s104 = sphi 0, %s101
    %s105 = sphi 0, %s104
    %s121 = sphi 0, %s105
    %s127 = sphi 0, %s129
    %s130 = sphi 0, %s127
    %s131 = sphi 0, %s130
    %s147 = sphi 0, %s131
  $region4: #{ctc_loss_neg.1} parent=0 // loop_header_branch
    %12 = sbr.rel (%p10) target = $region8
  $region5: #{ctc_loss_neg.1} parent=0 // loop_body
    %s14 = ssub.s32 %s9, 1
    %s15 = ssub.s32 %s9, 2
    %s22 = sadd.s32 1, %s17
    %p23 = scmp.ge.s32.totalorder %s22, 1
    %s24 = scalar_select %p23, 0, %s22
    %s25 = sadd.s32 1, %s16
    %s26 = scalar_select %p23, %s25, %s16
    %p27 = scmp.ge.s32.totalorder %s26, 2
    %s28 = scalar_select %p27, 0, %s26
    %s29 = sadd.s32 %s16, %s17
    %p30 = scmp.lt.s32.totalorder %s29, 0
    %s31 = scalar_select %p30, %s29, 0
    %s32 = sadd.s32 %s28, %s24
    %p33 = scmp.lt.s32.totalorder %s32, 0
    %s34 = scalar_select %p33, %s32, 0
    %s35 = ssub.s32 %s31, %s34
    %p36 = scmp.eq.s32.totalorder %s35, 0
    %s38 = sadd.s32 %s37, 1
    %s39 = scalar_select %p36, %s37, %s38
    %p42 = pneg %p36
    %p43 = scmp.eq.s32.totalorder %s9, 1
    %p44 = por %p42, %p43
    %p45 = scmp.ne.s32.totalorder %s37, %s40
    %p46 = scmp.eq.s32.totalorder %s9, 0
    %p47 = por %p45, %p46
    %p48 = scmp.ne.s32.totalorder %s37, %s40
    %p49 = scmp.eq.s32.totalorder %s14, 1
    %p50 = por %p48, %p49
    %p51 = scmp.ne.s32.totalorder %s40, %s41
    %p52 = scmp.eq.s32.totalorder %s14, 0
    %p53 = por %p51, %p52
    %p54 = scmp.ne.s32.totalorder %s40, %s41
    %p55 = scmp.eq.s32.totalorder %s15, 1
    %p56 = por %p54, %p55
    %p58 = scmp.ne.s32.totalorder %s41, %s57
    %p59 = scmp.eq.s32.totalorder %s15, 0
    %p60 = por %p58, %p59
    %s61 = sadd.s32 %s16, %s17
    %p62 = scmp.lt.s32.totalorder %s61, 0
    %s63 = scalar_select %p62, %s61, 0
    %s64 = sadd.s32 %s28, %s24
    %p65 = scmp.lt.s32.totalorder %s64, 0
    %s66 = scalar_select %p65, %s64, 0
    %s67 = ssub.s32 %s63, %s66
    %p68 = scmp.eq.s32.totalorder %s67, 0
    %s70 = sadd.s32 %s69, 1
    %s71 = scalar_select %p68, %s69, %s70
    %p74 = pneg %p68
    %p75 = scmp.eq.s32.totalorder %s9, 1
    %p76 = por %p74, %p75
    %p77 = scmp.ne.s32.totalorder %s69, %s72
    %p78 = scmp.eq.s32.totalorder %s9, 0
    %p79 = por %p77, %p78
    %p80 = scmp.ne.s32.totalorder %s69, %s72
    %p81 = scmp.eq.s32.totalorder %s14, 1
    %p82 = por %p80, %p81
    %p83 = scmp.ne.s32.totalorder %s72, %s73
    %p84 = scmp.eq.s32.totalorder %s14, 0
    %p85 = por %p83, %p84
    %p86 = scmp.ne.s32.totalorder %s72, %s73
    %p87 = scmp.eq.s32.totalorder %s15, 1
    %p88 = por %p86, %p87
    %p90 = scmp.ne.s32.totalorder %s73, %s89
    %p91 = scmp.eq.s32.totalorder %s15, 0
    %p92 = por %p90, %p91
    %s93 = sadd.s32 %s16, %s17
    %p94 = scmp.lt.s32.totalorder %s93, 0
    %s95 = scalar_select %p94, %s93, 0
    %s96 = sadd.s32 %s28, %s24
    %p97 = scmp.lt.s32.totalorder %s96, 0
    %s98 = scalar_select %p97, %s96, 0
    %s99 = ssub.s32 %s95, %s98
    %p100 = scmp.eq.s32.totalorder %s99, 0
    %s102 = sadd.s32 %s101, 1
    %s103 = scalar_select %p100, %s101, %s102
    %p106 = pneg %p100
    %p107 = scmp.eq.s32.totalorder %s9, 1
    %p108 = por %p106, %p107
    %p109 = scmp.ne.s32.totalorder %s101, %s104
    %p110 = scmp.eq.s32.totalorder %s9, 0
    %p111 = por %p109, %p110
    %p112 = scmp.ne.s32.totalorder %s101, %s104
    %p113 = scmp.eq.s32.totalorder %s14, 1
    %p114 = por %p112, %p113
    %p115 = scmp.ne.s32.totalorder %s104, %s105
    %p116 = scmp.eq.s32.totalorder %s14, 0
    %p117 = por %p115, %p116
    %p118 = scmp.ne.s32.totalorder %s104, %s105
    %p119 = scmp.eq.s32.totalorder %s15, 1
    %p120 = por %p118, %p119
    %p122 = scmp.ne.s32.totalorder %s105, %s121
    %p123 = scmp.eq.s32.totalorder %s15, 0
    %p124 = por %p122, %p123
    %s125 = ssub.s32 %s16, %s28
    %p126 = scmp.eq.s32.totalorder %s125, 0
    %s128 = sadd.s32 %s127, 1
    %s129 = scalar_select %p126, %s127, %s128
    %p132 = pneg %p126
    %p133 = scmp.eq.s32.totalorder %s9, 1
    %p134 = por %p132, %p133
    %p135 = scmp.ne.s32.totalorder %s127, %s130
    %p136 = scmp.eq.s32.totalorder %s9, 0
    %p137 = por %p135, %p136
    %p138 = scmp.ne.s32.totalorder %s127, %s130
    %p139 = scmp.eq.s32.totalorder %s14, 1
    %p140 = por %p138, %p139
    %p141 = scmp.ne.s32.totalorder %s130, %s131
    %p142 = scmp.eq.s32.totalorder %s14, 0
    %p143 = por %p141, %p142
    %p144 = scmp.ne.s32.totalorder %s130, %s131
    %p145 = scmp.eq.s32.totalorder %s15, 1
    %p146 = por %p144, %p145
    %p148 = scmp.ne.s32.totalorder %s131, %s147
    %p149 = scmp.eq.s32.totalorder %s15, 0
    %p150 = por %p148, %p149
    %p151 = scmp.le.s32.totalorder 1, %s9
    %p152 = scmp.lt.s32.totalorder %s9, 3
    %p153 = pnand %p151, %p152
    %p154 = pneg %p153
    // Predicated region
    $region9: #{ctc_loss_neg.1} parent=5 // pred_check
      _
    $region10: #{ctc_loss_neg.1} parent=5 // pred_check_branch
      %156 = sbr.rel (%p153) target = $region12
    $region11: #{ctc_loss_neg.1} parent=5 // pred_region
      %s157 = ssub.s32 %s9, 1
    $region12: #{ctc_loss_neg.1} parent=5 // pred_fallthru
      _
    %p158 = scmp.lt.s32.totalorder %s9, 2
    // Predicated region
    $region13: #{ctc_loss_neg.1} parent=5 // pred_check
      %p159 = pneg %p158
    $region14: #{ctc_loss_neg.1} parent=5 // pred_check_branch
      %161 = sbr.rel (%p159) target = $region16
    $region15: #{ctc_loss_neg.1} parent=5 // pred_region
      // Predicated region
      $region17: #{ctc_loss_neg.1} parent=15 // pred_check
        %p162 = pneg %p47
      $region18: #{ctc_loss_neg.1} parent=15 // pred_check_branch
        %164 = sbr.rel (%p162) target = $region20
      $region19: #{ctc_loss_neg.1} parent=15 // pred_region
        %s165 = sadd.s32 %s16, %s17
        %p166 = scmp.lt.s32.totalorder %s165, 0
        %s167 = scalar_select %p166, %s165, 0
        %p168 = scmp.lt.s32.totalorder %s167, 0
        %s169 = scalar_select %p168, %s167, 0
        %s170 = smul.addr %s169, 8
        %s171 = scalar_lea.vmem %s0, %s170
        %s172 = sadd.s32 %s16, %s17
        %p173 = scmp.lt.s32.totalorder %s172, 0
        %s174 = scalar_select %p173, %s172, 0
      $region20: #{ctc_loss_neg.1} parent=15 // pred_fallthru
        _
      // Predicated region
      $region21: #{ctc_loss_neg.1} parent=15 // pred_check
        %p175 = pneg %p79
      $region22: #{ctc_loss_neg.1} parent=15 // pred_check_branch
        %177 = sbr.rel (%p175) target = $region24
      $region23: #{ctc_loss_neg.1} parent=15 // pred_region
        %s178 = sadd.s32 %s16, %s17
        %p179 = scmp.lt.s32.totalorder %s178, 0
        %s180 = scalar_select %p179, %s178, 0
        %p181 = scmp.lt.s32.totalorder %s180, 0
        %s182 = scalar_select %p181, %s180, 0
        %s183 = smul.addr %s182, 4
        %s184 = scalar_lea.vmem %s1, %s183
        %s185 = sadd.s32 %s16, %s17
        %p186 = scmp.lt.s32.totalorder %s185, 0
        %s187 = scalar_select %p186, %s185, 0
      $region24: #{ctc_loss_neg.1} parent=15 // pred_fallthru
        _
      // Predicated region
      $region25: #{ctc_loss_neg.1} parent=15 // pred_check
        %p188 = pneg %p111
      $region26: #{ctc_loss_neg.1} parent=15 // pred_check_branch
        %190 = sbr.rel (%p188) target = $region28
      $region27: #{ctc_loss_neg.1} parent=15 // pred_region
        %s191 = sadd.s32 %s16, %s17
        %p192 = scmp.lt.s32.totalorder %s191, 0
        %s193 = scalar_select %p192, %s191, 0
        %p194 = scmp.lt.s32.totalorder %s193, 0
        %s195 = scalar_select %p194, %s193, 0
        %s196 = scalar_lea.vmem %s2, %s195
        %s197 = sadd.s32 %s16, %s17
        %p198 = scmp.lt.s32.totalorder %s197, 0
        %s199 = scalar_select %p198, %s197, 0
      $region28: #{ctc_loss_neg.1} parent=15 // pred_fallthru
        _
    $region16: #{ctc_loss_neg.1} parent=5 // pred_fallthru
      _
    %p200 = scmp.le.s32.totalorder 1, %s9
    %p201 = scmp.lt.s32.totalorder %s9, 3
    %p202 = pnand %p200, %p201
    %p203 = pneg %p202
    // Predicated region
    $region29: #{ctc_loss_neg.1} parent=5 // pred_check
      _
    $region30: #{ctc_loss_neg.1} parent=5 // pred_check_branch
      %205 = sbr.rel (%p202) target = $region32
    $region31: #{ctc_loss_neg.1} parent=5 // pred_region
      %s206 = ssub.s32 %s9, 1
      %s207 = sadd.s32 %s18, %s19
      %p208 = scmp.lt.s32.totalorder %s207, 0
      %s209 = scalar_select %p208, %s207, 0
      %p210 = scmp.lt.s32.totalorder %s209, 0
      %s211 = scalar_select %p210, %s209, 0
      %s212 = smul.addr %s211, 8
      %s213 = scalar_lea.vmem %s0, %s212
      %p214 = pneg %p53
      %p215 = pneg %p50
      %s216 = sadd.s32 %s18, %s19
      %p217 = scmp.lt.s32.totalorder %s216, 0
      %s218 = scalar_select %p217, %s216, 0
      %p219 = scmp.lt.s32.totalorder %s218, 0
      %s220 = scalar_select %p219, %s218, 0
      %s221 = smul.addr %s220, 4
      %s222 = scalar_lea.vmem %s1, %s221
      %p223 = pneg %p85
      %p224 = pneg %p82
      %s225 = sadd.s32 %s18, %s19
      %p226 = scmp.lt.s32.totalorder %s225, 0
      %s227 = scalar_select %p226, %s225, 0
      %p228 = scmp.lt.s32.totalorder %s227, 0
      %s229 = scalar_select %p228, %s227, 0
      %s230 = scalar_lea.vmem %s2, %s229
      %p231 = pneg %p117
      %p232 = pneg %p114
      %p233 = pneg %p143
      %p234 = pneg %p140
      %p235 = scmp.lt.s32.totalorder %s18, 1
      %s236 = scalar_select %p235, %s18, 1
      %s237 = scalar_lea.vmem %s3, %s236
      %s238 = sadd.s32 %s18, %s19
      %p239 = scmp.lt.s32.totalorder %s238, 0
      %s240 = scalar_select %p239, %s238, 0
      %p241 = scmp.lt.s32.totalorder %s240, 0
      %s242 = scalar_select %p241, %s240, 0
      %s243 = smul.addr %s242, 8
      %s244 = scalar_lea.vmem %s0, %s243
      %s245 = sadd.s32 %s18, %s19
      %p246 = scmp.lt.s32.totalorder %s245, 0
      %s247 = scalar_select %p246, %s245, 0
      %s248 = sadd.s32 %s18, %s19
      %p249 = scmp.lt.s32.totalorder %s248, 0
      %s250 = scalar_select %p249, %s248, 0
      %p251 = scmp.lt.s32.totalorder %s250, 0
      %s252 = scalar_select %p251, %s250, 0
      %s253 = smul.addr %s252, 4
      %s254 = scalar_lea.vmem %s1, %s253
      %s255 = sadd.s32 %s18, %s19
      %p256 = scmp.lt.s32.totalorder %s255, 0
      %s257 = scalar_select %p256, %s255, 0
      %s258 = sadd.s32 %s18, %s19
      %p259 = scmp.lt.s32.totalorder %s258, 0
      %s260 = scalar_select %p259, %s258, 0
      %p261 = scmp.lt.s32.totalorder %s260, 0
      %s262 = scalar_select %p261, %s260, 0
      %s263 = scalar_lea.vmem %s2, %s262
      %s264 = sadd.s32 %s18, %s19
      %p265 = scmp.lt.s32.totalorder %s264, 0
      %s266 = scalar_select %p265, %s264, 0
      %p267 = scmp.lt.s32.totalorder %s18, 1
      %s268 = scalar_select %p267, %s18, 1
      %s269 = scalar_lea.vmem %s3, %s268
      %p270 = scmp.eq.s32.totalorder %s19, 0
      // Predicated region
      $region33: #{ctc_loss_neg.1} parent=31 // pred_check
        %p271 = pneg %p270
      $region34: #{ctc_loss_neg.1} parent=31 // pred_check_branch
        %273 = sbr.rel (%p271) target = $region36
      $region35: #{ctc_loss_neg.1} parent=31 // pred_region
        %274 = vst [vmem:[%s269] sm:$0x1] 0.0
      $region36: #{ctc_loss_neg.1} parent=31 // pred_fallthru
        _
      %v275 = vld [vmem:[%s244] sm:$0xff]
      %v276 = vld [vmem:[%s244 + $0x8] sm:$0xff]
      %v277 = vld [vmem:[%s244 + $0x10] sm:$0xf]
      %v278 = vld [vmem:[%s254] sm:$0xf]
      %v279 = vld [vmem:[%s254 + $0x4] sm:$0xf]
      %v280 = vld [vmem:[%s254 + $0x8] sm:$0x3]
      %v281 = vunpack.c.l.bf16 %v278
      %v282 = vunpack.c.l.bf16 %v279
      %v283 = vunpack.c.l.bf16 %v280
      %v284 = vld [vmem:[%s263] sm:$0x1]
      %v285 = vunpack.c.l.bf16 %v284
      %v286 = vmax.f32 %v275, 0.0
      %v287 = vmax.f32 %v276, 0.0
      %v288 = vmax.f32 %v277, 0.0
      %v289 = vand.u32 2147483647, %v275
      %v290 = vand.u32 2147483647, %v276
      %v291 = vand.u32 2147483647, %v277
      %v292 = vsub.f32 0.0, %v289
      %v293 = vsub.f32 0.0, %v290
      %v294 = vsub.f32 0.0, %v291
      %v295 = vmul.f32 %v292, 1.442695
      %v296 = vpow.pop %v295
      %v297 = vmul.f32 %v293, 1.442695
      %v298 = vpow.pop %v297
      %v299 = vmul.f32 %v294, 1.442695
      %v300 = vpow.pop %v299
      %v301 = vadd.f32 %v296, 1.0
      %v302 = vlog2.pop %v301
      %v303 = vmul.f32 %v302, 0.6931472
      %v304 = vmul.f32 -0.5, %v296
      %v305 = vadd.f32 %v304, 1.0
      %v306 = vmul.f32 %v305, %v296
      %v307 = vand.u32 2147483647, %v296
      %vm308 = vcmp.lt.f32.partialorder %v307, 0.0004427343
      %v309 = vsel %vm308, %v306, %v303
      %v310 = vadd.f32 %v298, 1.0
      %v311 = vlog2.pop %v310
      %v312 = vmul.f32 %v311, 0.6931472
      %v313 = vmul.f32 -0.5, %v298
      %v314 = vadd.f32 %v313, 1.0
      %v315 = vmul.f32 %v314, %v298
      %v316 = vand.u32 2147483647, %v298
      %vm317 = vcmp.lt.f32.partialorder %v316, 0.0004427343
      %v318 = vsel %vm317, %v315, %v312
      %v319 = vadd.f32 %v300, 1.0
      %v320 = vlog2.pop %v319
      %v321 = vmul.f32 %v320, 0.6931472
      %v322 = vmul.f32 -0.5, %v300
      %v323 = vadd.f32 %v322, 1.0
      %v324 = vmul.f32 %v323, %v300
      %v325 = vand.u32 2147483647, %v300
      %vm326 = vcmp.lt.f32.partialorder %v325, 0.0004427343
      %v327 = vsel %vm326, %v324, %v321
      %v328 = vadd.f32 %v286, %v309
      %v329 = vadd.f32 %v287, %v318
      %v330 = vadd.f32 %v288, %v327
      %v331 = vsub.f32 0.0, %v328
      %v332 = vsub.f32 0.0, %v329
      %v333 = vsub.f32 0.0, %v330
      %v334 = vmul.f32 %v281, %v275
      %v335 = vmul.f32 %v282, %v276
      %v336 = vmul.f32 %v283, %v277
      %v337 = vadd.f32 %v331, %v334
      %v338 = vadd.f32 %v332, %v335
      %v339 = vadd.f32 %v333, %v336
      %v340 = vadd.f32 %v337, %v338
      %vm341 = vcmask 1043456
      %v342 = vsel %vm341, %v339, 0.0
      %v343 = vadd.f32 %v340, %v342
      %v344 = vrot.slane %v343, 4
      %v345 = vadd.f32 %v343, %v344
      %v346 = vrot.slane %v345, 2
      %v347 = vadd.f32 %v345, %v346
      %v348 = vrot.slane %v347, 1
      %v349 = vadd.f32 %v347, %v348
      %s350 = sadd.s32 %s18, %s19
      %s351 = smul.u32 %s350, 128
      %v352 = vlaneseq
      %v353 = vand.u32 %v352, 127
      %v354 = vstv %s351
      %v355 = vadd.s32 %v354, %v353
      %vm356 = vcmp.gt.f32.partialorder %v285, 0.5
      %vm357 = vcmp.lt.s32.totalorder %v355, 32
      %vm358 = vmand %vm356, %vm357
      %v359 = vsel %vm358, %v349, 0.0
      %v360 = vld [vmem:[%s269] sm:$0x1]
      %v361 = vadd.f32 %v360, %v359
      %362 = vst [vmem:[%s269] sm:$0x1] %v361
      %p363 = scmp.lt.s32.totalorder %s18, 1
      %s364 = scalar_select %p363, %s18, 1
      %s365 = scalar_lea.vmem %s3, %s364
      // Predicated region
      $region37: #{ctc_loss_neg.1} parent=31 // pred_check
        %p366 = pneg %p140
      $region38: #{ctc_loss_neg.1} parent=31 // pred_check_branch
        %368 = sbr.rel (%p366) target = $region40
      $region39: #{ctc_loss_neg.1} parent=31 // pred_region
        _
      $region40: #{ctc_loss_neg.1} parent=31 // pred_fallthru
        _
    $region32: #{ctc_loss_neg.1} parent=5 // pred_fallthru
      _
    %p369 = scmp.le.s32.totalorder 2, %s9
    // Predicated region
    $region41: #{ctc_loss_neg.1} parent=5 // pred_check
      %p370 = pneg %p369
    $region42: #{ctc_loss_neg.1} parent=5 // pred_check_branch
      %372 = sbr.rel (%p370) target = $region44
    $region43: #{ctc_loss_neg.1} parent=5 // pred_region
      %s373 = ssub.s32 %s9, 2
      // Predicated region
      $region45: #{ctc_loss_neg.1} parent=43 // pred_check
        %p374 = pneg %p146
      $region46: #{ctc_loss_neg.1} parent=43 // pred_check_branch
        %376 = sbr.rel (%p374) target = $region48
      $region47: #{ctc_loss_neg.1} parent=43 // pred_region
        %p377 = scmp.lt.s32.totalorder %s20, 1
        %s378 = scalar_select %p377, %s20, 1
        %s379 = scalar_lea.vmem %s3, %s378
      $region48: #{ctc_loss_neg.1} parent=43 // pred_fallthru
        _
    $region44: #{ctc_loss_neg.1} parent=5 // pred_fallthru
      _
  $region6: #{ctc_loss_neg.1} parent=0 // loop_footer
    %s13 = sadd.s32 1, %s9
  $region7: #{ctc_loss_neg.1} parent=0 // loop_footer_branch
    %8 = sbr.rel target = $region3
  $region8: #{ctc_loss_neg.1} parent=0 // loop_exit
    _

</llo_original>
